<compile_context>
chip_gen: v5e
topology: v5e:2x2
jax: 0.10.0
libtpu: 0.0.40
codegen_flags: <defaults>
</compile_context>

<pallas_src>
import jax
import jax.numpy as jnp
from jax.experimental import pallas as pl
from jax.experimental.pallas import tpu as pltpu

_LANE = 128
_SUBLANE = 8


def _round_up(n, m):
    return ((n + m - 1) // m) * m


def qnet_kernel(x_ref, w1_ref, w2_ref, w3_ref, b1_ref, b2_ref, b3_ref, o_ref):
    # fc1 + ReLU: cast the activations to bf16 in-kernel (VPU, hidden under
    # MXU) so the big matmul runs bf16 x bf16 with f32 accumulation.
    x = x_ref[...].astype(jnp.bfloat16)
    h1 = jnp.dot(x, w1_ref[...], preferred_element_type=jnp.float32)
    h1 = jnp.maximum(h1 + b1_ref[...], 0.0)

    # fc2 + ReLU: tiny matmul, keep f32 throughout (no bf16 VPU work).
    h2 = jnp.dot(h1, w2_ref[...], preferred_element_type=jnp.float32)
    h2 = jnp.maximum(h2 + b2_ref[...], 0.0)

    # fc3 (no activation): lane-dense 128-wide store (zero-padded columns).
    out = jnp.dot(h2, w3_ref[...], preferred_element_type=jnp.float32)
    o_ref[...] = (out + b3_ref[...]).astype(o_ref.dtype)


def qnet_forward(x, params, *, block_b=512):
    """x: (B, C, H, W) float32; params: dict of f32 weights/biases.

    Weights stored transposed as (in_features, out_features).
    Returns (B, action_dim) float32 Q-values.
    """
    B = x.shape[0]
    x_flat = x.reshape(B, -1)
    D = x_flat.shape[1]

    w1, b1 = params["w1"], params["b1"]
    w2, b2 = params["w2"], params["b2"]
    w3, b3 = params["w3"], params["b3"]
    H1, H2, A = w1.shape[1], w2.shape[1], w3.shape[1]

    # Lane-align every feature dim; sublane-align the batch tile.
    Dp = _round_up(D, _LANE)
    H1p = _round_up(H1, _LANE)
    H2p = _round_up(H2, _LANE)
    Ap = _round_up(A, _LANE)

    TB = _round_up(min(block_b, _round_up(B, _SUBLANE)), _SUBLANE)
    Bp = _round_up(B, TB)

    # Pad the activations only if needed (avoids an extra HBM pass when the
    # batch/feature dims already align).  x stays f32: cast happens in-kernel.
    if (Bp, Dp) != x_flat.shape:
        xp = jnp.zeros((Bp, Dp), x_flat.dtype).at[:B, :D].set(x_flat)
    else:
        xp = x_flat

    # One-time weight/bias padding (tiny; all VMEM-resident across the grid).
    w1p = jnp.zeros((Dp, H1p), jnp.bfloat16).at[:D, :H1].set(
        w1.astype(jnp.bfloat16))
    w2p = jnp.zeros((H1p, H2p), jnp.float32).at[:H1, :H2].set(w2)
    w3p = jnp.zeros((H2p, Ap), jnp.float32).at[:H2, :A].set(w3)
    b1p = jnp.zeros((1, H1p), jnp.float32).at[:, :H1].set(b1.reshape(1, -1))
    b2p = jnp.zeros((1, H2p), jnp.float32).at[:, :H2].set(b2.reshape(1, -1))
    b3p = jnp.zeros((1, Ap), jnp.float32).at[:, :A].set(b3.reshape(1, -1))

    grid = (Bp // TB,)

    flops = 2 * Bp * (Dp * H1p + H1p * H2p + H2p * Ap)
    bytes_accessed = (
        xp.size * 4 + w1p.size * 2
        + (w2p.size + w3p.size + b1p.size + b2p.size + b3p.size) * 4
        + Bp * Ap * 4)

    out = pl.pallas_call(
        qnet_kernel,
        out_shape=jax.ShapeDtypeStruct((Bp, Ap), jnp.float32),
        grid=grid,
        in_specs=[
            pl.BlockSpec((TB, Dp), lambda i: (i, 0)),     # x: batch-tiled
            pl.BlockSpec((Dp, H1p), lambda i: (0, 0)),    # w1 (bf16, resident)
            pl.BlockSpec((H1p, H2p), lambda i: (0, 0)),   # w2
            pl.BlockSpec((H2p, Ap), lambda i: (0, 0)),    # w3
            pl.BlockSpec((1, H1p), lambda i: (0, 0)),     # b1
            pl.BlockSpec((1, H2p), lambda i: (0, 0)),     # b2
            pl.BlockSpec((1, Ap), lambda i: (0, 0)),      # b3
        ],
        out_specs=pl.BlockSpec((TB, Ap), lambda i: (i, 0)),
        compiler_params=pltpu.CompilerParams(
            dimension_semantics=("parallel",)),
        cost_estimate=pl.CostEstimate(
            flops=flops, bytes_accessed=bytes_accessed, transcendentals=0),
    )(xp, w1p, w2p, w3p, b1p, b2p, b3p)

    return out[:B, :A]


def init_params(key, state_dim, hidden_dim, action_dim):
    """Init matching torch.nn.Linear default U[-1/sqrt(fan_in), 1/sqrt(fan_in)].
    Weights stored transposed: (in_features, out_features)."""
    d_in = state_dim[0] * state_dim[1] * state_dim[2]
    h = hidden_dim
    h2 = hidden_dim // 2
    dims = [(d_in, h), (h, h2), (h2, action_dim)]
    params = {}
    for i, (fi, fo) in enumerate(dims, start=1):
        key, kw, kb = jax.random.split(key, 3)
        bound = 1.0 / jnp.sqrt(fi)
        params[f"w{i}"] = jax.random.uniform(kw, (fi, fo), jnp.float32, -bound, bound)
        params[f"b{i}"] = jax.random.uniform(kb, (1, fo), jnp.float32, -bound, bound)
    return params


if __name__ == "__main__":
    # Small shapes consistent with the module: state_dim=(C,H,W)=(4,16,16),
    # hidden_dim=32 (-> 16), action_dim=4, batch=2.
    state_dim = (4, 16, 16)
    hidden_dim = 32
    action_dim = 4
    batch = 2

    key = jax.random.PRNGKey(0)
    key, kx = jax.random.split(key)
    x = jax.random.normal(kx, (batch,) + state_dim, dtype=jnp.float32)

    params = init_params(key, state_dim, hidden_dim, action_dim)

    fwd = jax.jit(qnet_forward)
    out = fwd(x, params)
    jax.block_until_ready(out)
    assert out.shape == (batch, action_dim)

    # Pure-JAX reference. fc1 operands are quantized to bf16 to match the
    # kernel's MXU precision (f32 accumulation), so the tolerance stays tight.
    xf = x.reshape(batch, -1)
    xq = xf.astype(jnp.bfloat16).astype(jnp.float32)
    w1q = params["w1"].astype(jnp.bfloat16).astype(jnp.float32)
    ref = jnp.maximum(xq @ w1q + params["b1"], 0.0)
    ref = jnp.maximum(ref @ params["w2"] + params["b2"], 0.0)
    ref = ref @ params["w3"] + params["b3"]
    assert jnp.allclose(out, ref, atol=2e-3, rtol=2e-3), "mismatch vs reference"

    print("KERNEL_OK")
</pallas_src>

<mosaic_0001>
module attributes {stable_mosaic.version = 11 : i64} {
  func.func @qnet_kernel(%arg0: i32, %arg1: memref<8x1024xf32, #tpu.memory_space<vmem>>, %arg2: memref<1024x128xbf16, #tpu.memory_space<vmem>>, %arg3: memref<128x128xf32, #tpu.memory_space<vmem>>, %arg4: memref<128x128xf32, #tpu.memory_space<vmem>>, %arg5: memref<1x128xf32, #tpu.memory_space<vmem>>, %arg6: memref<1x128xf32, #tpu.memory_space<vmem>>, %arg7: memref<1x128xf32, #tpu.memory_space<vmem>>, %arg8: memref<8x128xf32, #tpu.memory_space<vmem>>) attributes {dimension_semantics = [#tpu.dimension_semantics<parallel>], iteration_bounds = array<i64: 1>, scalar_prefetch = 0 : i64, scratch_operands = 0 : i64, tpu.core_type = #tpu.core_type<tc>, window_params = [{transform_indices = @transform_0, window_bounds = array<i64: 8, 1024>}, {pipeline_mode = #tpu.pipeline_mode<synchronous>, transform_indices = @transform_1, window_bounds = array<i64: 1024, 128>}, {pipeline_mode = #tpu.pipeline_mode<synchronous>, transform_indices = @transform_2, window_bounds = array<i64: 128, 128>}, {pipeline_mode = #tpu.pipeline_mode<synchronous>, transform_indices = @transform_3, window_bounds = array<i64: 128, 128>}, {pipeline_mode = #tpu.pipeline_mode<synchronous>, transform_indices = @transform_4, window_bounds = array<i64: 1, 128>}, {pipeline_mode = #tpu.pipeline_mode<synchronous>, transform_indices = @transform_5, window_bounds = array<i64: 1, 128>}, {pipeline_mode = #tpu.pipeline_mode<synchronous>, transform_indices = @transform_6, window_bounds = array<i64: 1, 128>}, {transform_indices = @transform_7, window_bounds = array<i64: 8, 128>}]} {
    %c0 = arith.constant 0 : index
    %c0_0 = arith.constant 0 : index
    %0 = vector.load %arg1[%c0, %c0_0] : memref<8x1024xf32, #tpu.memory_space<vmem>>, vector<8x1024xf32>
    %1 = arith.truncf %0 : vector<8x1024xf32> to vector<8x1024xbf16>
    %c0_1 = arith.constant 0 : index
    %c0_2 = arith.constant 0 : index
    %2 = vector.load %arg2[%c0_1, %c0_2] : memref<1024x128xbf16, #tpu.memory_space<vmem>>, vector<1024x128xbf16>
    %cst = arith.constant dense<0.000000e+00> : vector<8x128xf32>
    %3 = tpu.matmul %1, %2, %cst {dimension_numbers = #tpu.dot_dimension_numbers<[1], [0], [0], [1], [0, 0, 1, 1], [], []>} : vector<8x1024xbf16>, vector<1024x128xbf16>, vector<8x128xf32> -> vector<8x128xf32>
    %c0_3 = arith.constant 0 : index
    %c0_4 = arith.constant 0 : index
    %4 = vector.load %arg5[%c0_3, %c0_4] : memref<1x128xf32, #tpu.memory_space<vmem>>, vector<1x128xf32>
    %5 = vector.broadcast %4 : vector<1x128xf32> to vector<8x128xf32>
    %6 = arith.addf %3, %5 : vector<8x128xf32>
    %cst_5 = arith.constant 0.000000e+00 : f32
    %7 = vector.broadcast %cst_5 : f32 to vector<8x128xf32>
    %8 = arith.maximumf %6, %7 : vector<8x128xf32>
    %c0_6 = arith.constant 0 : index
    %c0_7 = arith.constant 0 : index
    %9 = vector.load %arg3[%c0_6, %c0_7] : memref<128x128xf32, #tpu.memory_space<vmem>>, vector<128x128xf32>
    %cst_8 = arith.constant dense<0.000000e+00> : vector<8x128xf32>
    %10 = tpu.matmul %8, %9, %cst_8 {dimension_numbers = #tpu.dot_dimension_numbers<[1], [0], [0], [1], [0, 0, 1, 1], [], []>} : vector<8x128xf32>, vector<128x128xf32>, vector<8x128xf32> -> vector<8x128xf32>
    %c0_9 = arith.constant 0 : index
    %c0_10 = arith.constant 0 : index
    %11 = vector.load %arg6[%c0_9, %c0_10] : memref<1x128xf32, #tpu.memory_space<vmem>>, vector<1x128xf32>
    %12 = vector.broadcast %11 : vector<1x128xf32> to vector<8x128xf32>
    %13 = arith.addf %10, %12 : vector<8x128xf32>
    %cst_11 = arith.constant 0.000000e+00 : f32
    %14 = vector.broadcast %cst_11 : f32 to vector<8x128xf32>
    %15 = arith.maximumf %13, %14 : vector<8x128xf32>
    %c0_12 = arith.constant 0 : index
    %c0_13 = arith.constant 0 : index
    %16 = vector.load %arg4[%c0_12, %c0_13] : memref<128x128xf32, #tpu.memory_space<vmem>>, vector<128x128xf32>
    %cst_14 = arith.constant dense<0.000000e+00> : vector<8x128xf32>
    %17 = tpu.matmul %15, %16, %cst_14 {dimension_numbers = #tpu.dot_dimension_numbers<[1], [0], [0], [1], [0, 0, 1, 1], [], []>} : vector<8x128xf32>, vector<128x128xf32>, vector<8x128xf32> -> vector<8x128xf32>
    %c0_15 = arith.constant 0 : index
    %c0_16 = arith.constant 0 : index
    %18 = vector.load %arg7[%c0_15, %c0_16] : memref<1x128xf32, #tpu.memory_space<vmem>>, vector<1x128xf32>
    %19 = vector.broadcast %18 : vector<1x128xf32> to vector<8x128xf32>
    %20 = arith.addf %17, %19 : vector<8x128xf32>
    %c0_17 = arith.constant 0 : index
    %c0_18 = arith.constant 0 : index
    %21 = vector.load %arg8[%c0_17, %c0_18] : memref<8x128xf32, #tpu.memory_space<vmem>>, vector<8x128xf32>
    tpu.vector_store %arg8[%c0_17, %c0_18], %20 {strides = array<i32>} : memref<8x128xf32, #tpu.memory_space<vmem>>, vector<8x128xf32>,
    return
  }
  func.func @transform_0(%arg0: i32) -> (i32, i32) {
    %c0_i32 = arith.constant 0 : i32
    %c0_i32_0 = arith.constant 0 : i32
    return %arg0, %c0_i32 : i32, i32
  }
  func.func @transform_1(%arg0: i32) -> (i32, i32) {
    %c0_i32 = arith.constant 0 : i32
    %c0_i32_0 = arith.constant 0 : i32
    %c0_i32_1 = arith.constant 0 : i32
    return %c0_i32, %c0_i32_0 : i32, i32
  }
  func.func @transform_2(%arg0: i32) -> (i32, i32) {
    %c0_i32 = arith.constant 0 : i32
    %c0_i32_0 = arith.constant 0 : i32
    %c0_i32_1 = arith.constant 0 : i32
    return %c0_i32, %c0_i32_0 : i32, i32
  }
  func.func @transform_3(%arg0: i32) -> (i32, i32) {
    %c0_i32 = arith.constant 0 : i32
    %c0_i32_0 = arith.constant 0 : i32
    %c0_i32_1 = arith.constant 0 : i32
    return %c0_i32, %c0_i32_0 : i32, i32
  }
  func.func @transform_4(%arg0: i32) -> (i32, i32) {
    %c0_i32 = arith.constant 0 : i32
    %c0_i32_0 = arith.constant 0 : i32
    %c0_i32_1 = arith.constant 0 : i32
    return %c0_i32, %c0_i32_0 : i32, i32
  }
  func.func @transform_5(%arg0: i32) -> (i32, i32) {
    %c0_i32 = arith.constant 0 : i32
    %c0_i32_0 = arith.constant 0 : i32
    %c0_i32_1 = arith.constant 0 : i32
    return %c0_i32, %c0_i32_0 : i32, i32
  }
  func.func @transform_6(%arg0: i32) -> (i32, i32) {
    %c0_i32 = arith.constant 0 : i32
    %c0_i32_0 = arith.constant 0 : i32
    %c0_i32_1 = arith.constant 0 : i32
    return %c0_i32, %c0_i32_0 : i32, i32
  }
  func.func @transform_7(%arg0: i32) -> (i32, i32) {
    %c0_i32 = arith.constant 0 : i32
    %c0_i32_0 = arith.constant 0 : i32
    return %arg0, %c0_i32 : i32, i32
  }
}

</mosaic_0001>

<llo_original>
// kernel: qnet_forward.1
$region0: #{qnet_forward.1}
  #allocation0 [shape = 'u32[]', space=smem, size = 0x4, offset = 0x4, fixed_abs, tag = 'smem constant byte address 0x4 - core index']
  #allocation1 [shape = 'u32[72,128]{1,0:T(1,128)}', space=vmem, size = 0x9000, scoped, tag = 'internal scratch']
  %s0 = inlined_call_operand.vmem [shape: f32[8,1024], index: 0, kind: input, shape index: {}]
  %s1 = inlined_call_operand.vmem [shape: bf16[1024,128], index: 1, kind: input, shape index: {}]
  %s2 = inlined_call_operand.vmem [shape: f32[128,128], index: 2, kind: input, shape index: {}]
  %s3 = inlined_call_operand.vmem [shape: f32[128,128], index: 3, kind: input, shape index: {}]
  %s4 = inlined_call_operand.vmem [shape: f32[1,128], index: 4, kind: input, shape index: {}]
  %s5 = inlined_call_operand.vmem [shape: f32[1,128], index: 5, kind: input, shape index: {}]
  %s6 = inlined_call_operand.vmem [shape: f32[1,128], index: 6, kind: input, shape index: {}]
  %s7 = inlined_call_operand.vmem [shape: f32[8,128], index: 7, kind: output, shape index: {}]
  %s8 = sld [smem:[#allocation0]]
  $region38: #{qnet_forward.1} parent=0
    _
  %s10 = ssub.s32 1, %s8
  %s11 = scalar_select 0, %s10, %s8
  // Predicated region
  $region2: #{qnet_forward.1} parent=0 // pred_check
    _
  $region3: #{qnet_forward.1} parent=0 // pred_check_branch
    %13 = sbr.rel (0) target = $region5
  $region4: #{qnet_forward.1} parent=0 // pred_region
    _
  $region5: #{qnet_forward.1} parent=0 // pred_fallthru
    _
  // Predicated region
  $region6: #{qnet_forward.1} parent=0 // pred_check
    _
  $region7: #{qnet_forward.1} parent=0 // pred_check_branch
    %15 = sbr.rel (0) target = $region9
  $region8: #{qnet_forward.1} parent=0 // pred_region
    _
  $region9: #{qnet_forward.1} parent=0 // pred_fallthru
    _
  // Predicated region
  $region10: #{qnet_forward.1} parent=0 // pred_check
    _
  $region11: #{qnet_forward.1} parent=0 // pred_check_branch
    %17 = sbr.rel (0) target = $region13
  $region12: #{qnet_forward.1} parent=0 // pred_region
    _
  $region13: #{qnet_forward.1} parent=0 // pred_fallthru
    _
  // Predicated region
  $region14: #{qnet_forward.1} parent=0 // pred_check
    _
  $region15: #{qnet_forward.1} parent=0 // pred_check_branch
    %19 = sbr.rel (0) target = $region17
  $region16: #{qnet_forward.1} parent=0 // pred_region
    _
  $region17: #{qnet_forward.1} parent=0 // pred_fallthru
    _
  // Predicated region
  $region18: #{qnet_forward.1} parent=0 // pred_check
    _
  $region19: #{qnet_forward.1} parent=0 // pred_check_branch
    %21 = sbr.rel (0) target = $region21
  $region20: #{qnet_forward.1} parent=0 // pred_region
    _
  $region21: #{qnet_forward.1} parent=0 // pred_fallthru
    _
  // Predicated region
  $region22: #{qnet_forward.1} parent=0 // pred_check
    _
  $region23: #{qnet_forward.1} parent=0 // pred_check_branch
    %23 = sbr.rel (0) target = $region25
  $region24: #{qnet_forward.1} parent=0 // pred_region
    _
  $region25: #{qnet_forward.1} parent=0 // pred_fallthru
    _
  // Predicated region
  $region26: #{qnet_forward.1} parent=0 // pred_check
    _
  $region27: #{qnet_forward.1} parent=0 // pred_check_branch
    %25 = sbr.rel (0) target = $region29
  $region28: #{qnet_forward.1} parent=0 // pred_region
    _
  $region29: #{qnet_forward.1} parent=0 // pred_fallthru
    _
  %v26 = vld [vmem:[%s0] sm:$0xff]
  %v27 = vld [vmem:[%s0 + $0x8] sm:$0xff]
  %v28 = vld [vmem:[%s0 + $0x10] sm:$0xff]
  %v29 = vld [vmem:[%s0 + $0x18] sm:$0xff]
  %v30 = vld [vmem:[%s0 + $0x20] sm:$0xff]
  %v31 = vld [vmem:[%s0 + $0x28] sm:$0xff]
  %v32 = vld [vmem:[%s0 + $0x30] sm:$0xff]
  %v33 = vld [vmem:[%s0 + $0x38] sm:$0xff]
  %v34 = vpack.c.bf16 %v26, %v26
  %v35 = vpack.c.bf16 %v27, %v27
  %v36 = vpack.c.bf16 %v28, %v28
  %v37 = vpack.c.bf16 %v29, %v29
  %v38 = vpack.c.bf16 %v30, %v30
  %v39 = vpack.c.bf16 %v31, %v31
  %v40 = vpack.c.bf16 %v32, %v32
  %v41 = vpack.c.bf16 %v33, %v33
  %v42 = vld [vmem:[%s1] sm:$0xf]
  %v43 = vld [vmem:[%s1 + $0x4] sm:$0xf]
  %v44 = vld [vmem:[%s1 + $0x8] sm:$0xf]
  %v45 = vld [vmem:[%s1 + $0xc] sm:$0xf]
  %v46 = vld [vmem:[%s1 + $0x10] sm:$0xf]
  %v47 = vld [vmem:[%s1 + $0x14] sm:$0xf]
  %v48 = vld [vmem:[%s1 + $0x18] sm:$0xf]
  %v49 = vld [vmem:[%s1 + $0x1c] sm:$0xf]
  %v50 = vld [vmem:[%s1 + $0x20] sm:$0xf]
  %v51 = vld [vmem:[%s1 + $0x24] sm:$0xf]
  %v52 = vld [vmem:[%s1 + $0x28] sm:$0xf]
  %v53 = vld [vmem:[%s1 + $0x2c] sm:$0xf]
  %v54 = vld [vmem:[%s1 + $0x30] sm:$0xf]
  %v55 = vld [vmem:[%s1 + $0x34] sm:$0xf]
  %v56 = vld [vmem:[%s1 + $0x38] sm:$0xf]
  %v57 = vld [vmem:[%s1 + $0x3c] sm:$0xf]
  %v58 = vld [vmem:[%s1 + $0x40] sm:$0xf]
  %v59 = vld [vmem:[%s1 + $0x44] sm:$0xf]
  %v60 = vld [vmem:[%s1 + $0x48] sm:$0xf]
  %v61 = vld [vmem:[%s1 + $0x4c] sm:$0xf]
  %v62 = vld [vmem:[%s1 + $0x50] sm:$0xf]
  %v63 = vld [vmem:[%s1 + $0x54] sm:$0xf]
  %v64 = vld [vmem:[%s1 + $0x58] sm:$0xf]
  %v65 = vld [vmem:[%s1 + $0x5c] sm:$0xf]
  %v66 = vld [vmem:[%s1 + $0x60] sm:$0xf]
  %v67 = vld [vmem:[%s1 + $0x64] sm:$0xf]
  %v68 = vld [vmem:[%s1 + $0x68] sm:$0xf]
  %v69 = vld [vmem:[%s1 + $0x6c] sm:$0xf]
  %v70 = vld [vmem:[%s1 + $0x70] sm:$0xf]
  %v71 = vld [vmem:[%s1 + $0x74] sm:$0xf]
  %v72 = vld [vmem:[%s1 + $0x78] sm:$0xf]
  %v73 = vld [vmem:[%s1 + $0x7c] sm:$0xf]
  %v74 = vld [vmem:[%s1 + $0x80] sm:$0xf]
  %v75 = vld [vmem:[%s1 + $0x84] sm:$0xf]
  %v76 = vld [vmem:[%s1 + $0x88] sm:$0xf]
  %v77 = vld [vmem:[%s1 + $0x8c] sm:$0xf]
  %v78 = vld [vmem:[%s1 + $0x90] sm:$0xf]
  %v79 = vld [vmem:[%s1 + $0x94] sm:$0xf]
  %v80 = vld [vmem:[%s1 + $0x98] sm:$0xf]
  %v81 = vld [vmem:[%s1 + $0x9c] sm:$0xf]
  %v82 = vld [vmem:[%s1 + $0xa0] sm:$0xf]
  %v83 = vld [vmem:[%s1 + $0xa4] sm:$0xf]
  %v84 = vld [vmem:[%s1 + $0xa8] sm:$0xf]
  %v85 = vld [vmem:[%s1 + $0xac] sm:$0xf]
  %v86 = vld [vmem:[%s1 + $0xb0] sm:$0xf]
  %v87 = vld [vmem:[%s1 + $0xb4] sm:$0xf]
  %v88 = vld [vmem:[%s1 + $0xb8] sm:$0xf]
  %v89 = vld [vmem:[%s1 + $0xbc] sm:$0xf]
  %v90 = vld [vmem:[%s1 + $0xc0] sm:$0xf]
  %v91 = vld [vmem:[%s1 + $0xc4] sm:$0xf]
  %v92 = vld [vmem:[%s1 + $0xc8] sm:$0xf]
  %v93 = vld [vmem:[%s1 + $0xcc] sm:$0xf]
  %v94 = vld [vmem:[%s1 + $0xd0] sm:$0xf]
  %v95 = vld [vmem:[%s1 + $0xd4] sm:$0xf]
  %v96 = vld [vmem:[%s1 + $0xd8] sm:$0xf]
  %v97 = vld [vmem:[%s1 + $0xdc] sm:$0xf]
  %v98 = vld [vmem:[%s1 + $0xe0] sm:$0xf]
  %v99 = vld [vmem:[%s1 + $0xe4] sm:$0xf]
  %v100 = vld [vmem:[%s1 + $0xe8] sm:$0xf]
  %v101 = vld [vmem:[%s1 + $0xec] sm:$0xf]
  %v102 = vld [vmem:[%s1 + $0xf0] sm:$0xf]
  %v103 = vld [vmem:[%s1 + $0xf4] sm:$0xf]
  %v104 = vld [vmem:[%s1 + $0xf8] sm:$0xf]
  %v105 = vld [vmem:[%s1 + $0xfc] sm:$0xf]
  %v106 = vld [vmem:[%s1 + $0x100] sm:$0xf]
  %v107 = vld [vmem:[%s1 + $0x104] sm:$0xf]
  %v108 = vld [vmem:[%s1 + $0x108] sm:$0xf]
  %v109 = vld [vmem:[%s1 + $0x10c] sm:$0xf]
  %v110 = vld [vmem:[%s1 + $0x110] sm:$0xf]
  %v111 = vld [vmem:[%s1 + $0x114] sm:$0xf]
  %v112 = vld [vmem:[%s1 + $0x118] sm:$0xf]
  %v113 = vld [vmem:[%s1 + $0x11c] sm:$0xf]
  %v114 = vld [vmem:[%s1 + $0x120] sm:$0xf]
  %v115 = vld [vmem:[%s1 + $0x124] sm:$0xf]
  %v116 = vld [vmem:[%s1 + $0x128] sm:$0xf]
  %v117 = vld [vmem:[%s1 + $0x12c] sm:$0xf]
  %v118 = vld [vmem:[%s1 + $0x130] sm:$0xf]
  %v119 = vld [vmem:[%s1 + $0x134] sm:$0xf]
  %v120 = vld [vmem:[%s1 + $0x138] sm:$0xf]
  %v121 = vld [vmem:[%s1 + $0x13c] sm:$0xf]
  %v122 = vld [vmem:[%s1 + $0x140] sm:$0xf]
  %v123 = vld [vmem:[%s1 + $0x144] sm:$0xf]
  %v124 = vld [vmem:[%s1 + $0x148] sm:$0xf]
  %v125 = vld [vmem:[%s1 + $0x14c] sm:$0xf]
  %v126 = vld [vmem:[%s1 + $0x150] sm:$0xf]
  %v127 = vld [vmem:[%s1 + $0x154] sm:$0xf]
  %v128 = vld [vmem:[%s1 + $0x158] sm:$0xf]
  %v129 = vld [vmem:[%s1 + $0x15c] sm:$0xf]
  %v130 = vld [vmem:[%s1 + $0x160] sm:$0xf]
  %v131 = vld [vmem:[%s1 + $0x164] sm:$0xf]
  %v132 = vld [vmem:[%s1 + $0x168] sm:$0xf]
  %v133 = vld [vmem:[%s1 + $0x16c] sm:$0xf]
  %v134 = vld [vmem:[%s1 + $0x170] sm:$0xf]
  %v135 = vld [vmem:[%s1 + $0x174] sm:$0xf]
  %v136 = vld [vmem:[%s1 + $0x178] sm:$0xf]
  %v137 = vld [vmem:[%s1 + $0x17c] sm:$0xf]
  %v138 = vld [vmem:[%s1 + $0x180] sm:$0xf]
  %v139 = vld [vmem:[%s1 + $0x184] sm:$0xf]
  %v140 = vld [vmem:[%s1 + $0x188] sm:$0xf]
  %v141 = vld [vmem:[%s1 + $0x18c] sm:$0xf]
  %v142 = vld [vmem:[%s1 + $0x190] sm:$0xf]
  %v143 = vld [vmem:[%s1 + $0x194] sm:$0xf]
  %v144 = vld [vmem:[%s1 + $0x198] sm:$0xf]
  %v145 = vld [vmem:[%s1 + $0x19c] sm:$0xf]
  %v146 = vld [vmem:[%s1 + $0x1a0] sm:$0xf]
  %v147 = vld [vmem:[%s1 + $0x1a4] sm:$0xf]
  %v148 = vld [vmem:[%s1 + $0x1a8] sm:$0xf]
  %v149 = vld [vmem:[%s1 + $0x1ac] sm:$0xf]
  %v150 = vld [vmem:[%s1 + $0x1b0] sm:$0xf]
  %v151 = vld [vmem:[%s1 + $0x1b4] sm:$0xf]
  %v152 = vld [vmem:[%s1 + $0x1b8] sm:$0xf]
  %v153 = vld [vmem:[%s1 + $0x1bc] sm:$0xf]
  %v154 = vld [vmem:[%s1 + $0x1c0] sm:$0xf]
  %v155 = vld [vmem:[%s1 + $0x1c4] sm:$0xf]
  %v156 = vld [vmem:[%s1 + $0x1c8] sm:$0xf]
  %v157 = vld [vmem:[%s1 + $0x1cc] sm:$0xf]
  %v158 = vld [vmem:[%s1 + $0x1d0] sm:$0xf]
  %v159 = vld [vmem:[%s1 + $0x1d4] sm:$0xf]
  %v160 = vld [vmem:[%s1 + $0x1d8] sm:$0xf]
  %v161 = vld [vmem:[%s1 + $0x1dc] sm:$0xf]
  %v162 = vld [vmem:[%s1 + $0x1e0] sm:$0xf]
  %v163 = vld [vmem:[%s1 + $0x1e4] sm:$0xf]
  %v164 = vld [vmem:[%s1 + $0x1e8] sm:$0xf]
  %v165 = vld [vmem:[%s1 + $0x1ec] sm:$0xf]
  %v166 = vld [vmem:[%s1 + $0x1f0] sm:$0xf]
  %v167 = vld [vmem:[%s1 + $0x1f4] sm:$0xf]
  %v168 = vld [vmem:[%s1 + $0x1f8] sm:$0xf]
  %v169 = vld [vmem:[%s1 + $0x1fc] sm:$0xf]
  %v170 = vld [vmem:[%s4] sm:$0x1]
  %v172 = vperm.slane %v170, 0
  %v302 = vunpack.c.l.b16 %v42
  %v303 = vunpack.c.l.b16 %v43
  %v304 = vunpack.c.l.b16 %v44
  %v305 = vunpack.c.l.b16 %v45
  %v306 = vunpack.c.l.b16 %v46
  %v307 = vunpack.c.l.b16 %v47
  %v308 = vunpack.c.l.b16 %v48
  %v309 = vunpack.c.l.b16 %v49
  %v310 = vunpack.c.l.b16 %v50
  %v311 = vunpack.c.l.b16 %v51
  %v312 = vunpack.c.l.b16 %v52
  %v313 = vunpack.c.l.b16 %v53
  %v314 = vunpack.c.l.b16 %v54
  %v315 = vunpack.c.l.b16 %v55
  %v316 = vunpack.c.l.b16 %v56
  %v317 = vunpack.c.l.b16 %v57
  %v318 = vunpack.c.l.b16 %v58
  %v319 = vunpack.c.l.b16 %v59
  %v320 = vunpack.c.l.b16 %v60
  %v321 = vunpack.c.l.b16 %v61
  %v322 = vunpack.c.l.b16 %v62
  %v323 = vunpack.c.l.b16 %v63
  %v324 = vunpack.c.l.b16 %v64
  %v325 = vunpack.c.l.b16 %v65
  %v326 = vunpack.c.l.b16 %v66
  %v327 = vunpack.c.l.b16 %v67
  %v328 = vunpack.c.l.b16 %v68
  %v329 = vunpack.c.l.b16 %v69
  %v330 = vunpack.c.l.b16 %v70
  %v331 = vunpack.c.l.b16 %v71
  %v332 = vunpack.c.l.b16 %v72
  %v333 = vunpack.c.l.b16 %v73
  %v334 = vunpack.c.l.b16 %v74
  %v335 = vunpack.c.l.b16 %v75
  %v336 = vunpack.c.l.b16 %v76
  %v337 = vunpack.c.l.b16 %v77
  %v338 = vunpack.c.l.b16 %v78
  %v339 = vunpack.c.l.b16 %v79
  %v340 = vunpack.c.l.b16 %v80
  %v341 = vunpack.c.l.b16 %v81
  %v342 = vunpack.c.l.b16 %v82
  %v343 = vunpack.c.l.b16 %v83
  %v344 = vunpack.c.l.b16 %v84
  %v345 = vunpack.c.l.b16 %v85
  %v346 = vunpack.c.l.b16 %v86
  %v347 = vunpack.c.l.b16 %v87
  %v348 = vunpack.c.l.b16 %v88
  %v349 = vunpack.c.l.b16 %v89
  %v350 = vunpack.c.l.b16 %v90
  %v351 = vunpack.c.l.b16 %v91
  %v352 = vunpack.c.l.b16 %v92
  %v353 = vunpack.c.l.b16 %v93
  %v354 = vunpack.c.l.b16 %v94
  %v355 = vunpack.c.l.b16 %v95
  %v356 = vunpack.c.l.b16 %v96
  %v357 = vunpack.c.l.b16 %v97
  %v358 = vunpack.c.l.b16 %v98
  %v359 = vunpack.c.l.b16 %v99
  %v360 = vunpack.c.l.b16 %v100
  %v361 = vunpack.c.l.b16 %v101
  %v362 = vunpack.c.l.b16 %v102
  %v363 = vunpack.c.l.b16 %v103
  %v364 = vunpack.c.l.b16 %v104
  %v365 = vunpack.c.l.b16 %v105
  %v366 = vunpack.c.l.b16 %v106
  %v367 = vunpack.c.l.b16 %v107
  %v368 = vunpack.c.l.b16 %v108
  %v369 = vunpack.c.l.b16 %v109
  %v370 = vunpack.c.l.b16 %v110
  %v371 = vunpack.c.l.b16 %v111
  %v372 = vunpack.c.l.b16 %v112
  %v373 = vunpack.c.l.b16 %v113
  %v374 = vunpack.c.l.b16 %v114
  %v375 = vunpack.c.l.b16 %v115
  %v376 = vunpack.c.l.b16 %v116
  %v377 = vunpack.c.l.b16 %v117
  %v378 = vunpack.c.l.b16 %v118
  %v379 = vunpack.c.l.b16 %v119
  %v380 = vunpack.c.l.b16 %v120
  %v381 = vunpack.c.l.b16 %v121
  %v382 = vunpack.c.l.b16 %v122
  %v383 = vunpack.c.l.b16 %v123
  %v384 = vunpack.c.l.b16 %v124
  %v385 = vunpack.c.l.b16 %v125
  %v386 = vunpack.c.l.b16 %v126
  %v387 = vunpack.c.l.b16 %v127
  %v388 = vunpack.c.l.b16 %v128
  %v389 = vunpack.c.l.b16 %v129
  %v390 = vunpack.c.l.b16 %v130
  %v391 = vunpack.c.l.b16 %v131
  %v392 = vunpack.c.l.b16 %v132
  %v393 = vunpack.c.l.b16 %v133
  %v394 = vunpack.c.l.b16 %v134
  %v395 = vunpack.c.l.b16 %v135
  %v396 = vunpack.c.l.b16 %v136
  %v397 = vunpack.c.l.b16 %v137
  %v398 = vunpack.c.l.b16 %v138
  %v399 = vunpack.c.l.b16 %v139
  %v400 = vunpack.c.l.b16 %v140
  %v401 = vunpack.c.l.b16 %v141
  %v402 = vunpack.c.l.b16 %v142
  %v403 = vunpack.c.l.b16 %v143
  %v404 = vunpack.c.l.b16 %v144
  %v405 = vunpack.c.l.b16 %v145
  %v406 = vunpack.c.l.b16 %v146
  %v407 = vunpack.c.l.b16 %v147
  %v408 = vunpack.c.l.b16 %v148
  %v409 = vunpack.c.l.b16 %v149
  %v410 = vunpack.c.l.b16 %v150
  %v411 = vunpack.c.l.b16 %v151
  %v412 = vunpack.c.l.b16 %v152
  %v413 = vunpack.c.l.b16 %v153
  %v414 = vunpack.c.l.b16 %v154
  %v415 = vunpack.c.l.b16 %v155
  %v416 = vunpack.c.l.b16 %v156
  %v417 = vunpack.c.l.b16 %v157
  %v418 = vunpack.c.l.b16 %v158
  %v419 = vunpack.c.l.b16 %v159
  %v420 = vunpack.c.l.b16 %v160
  %v421 = vunpack.c.l.b16 %v161
  %v422 = vunpack.c.l.b16 %v162
  %v423 = vunpack.c.l.b16 %v163
  %v424 = vunpack.c.l.b16 %v164
  %v425 = vunpack.c.l.b16 %v165
  %v426 = vunpack.c.l.b16 %v166
  %v427 = vunpack.c.l.b16 %v167
  %v428 = vunpack.c.l.b16 %v168
  %v429 = vunpack.c.l.b16 %v169
  %v430 = vpack.c.b16 %v303, %v302
  %v431 = vpack.c.b16 %v305, %v304
  %v432 = vpack.c.b16 %v307, %v306
  %v433 = vpack.c.b16 %v309, %v308
  %v434 = vpack.c.b16 %v311, %v310
  %v435 = vpack.c.b16 %v313, %v312
  %v436 = vpack.c.b16 %v315, %v314
  %v437 = vpack.c.b16 %v317, %v316
  %v438 = vpack.c.b16 %v319, %v318
  %v439 = vpack.c.b16 %v321, %v320
  %v440 = vpack.c.b16 %v323, %v322
  %v441 = vpack.c.b16 %v325, %v324
  %v442 = vpack.c.b16 %v327, %v326
  %v443 = vpack.c.b16 %v329, %v328
  %v444 = vpack.c.b16 %v331, %v330
  %v445 = vpack.c.b16 %v333, %v332
  %v446 = vpack.c.b16 %v335, %v334
  %v447 = vpack.c.b16 %v337, %v336
  %v448 = vpack.c.b16 %v339, %v338
  %v449 = vpack.c.b16 %v341, %v340
  %v450 = vpack.c.b16 %v343, %v342
  %v451 = vpack.c.b16 %v345, %v344
  %v452 = vpack.c.b16 %v347, %v346
  %v453 = vpack.c.b16 %v349, %v348
  %v454 = vpack.c.b16 %v351, %v350
  %v455 = vpack.c.b16 %v353, %v352
  %v456 = vpack.c.b16 %v355, %v354
  %v457 = vpack.c.b16 %v357, %v356
  %v458 = vpack.c.b16 %v359, %v358
  %v459 = vpack.c.b16 %v361, %v360
  %v460 = vpack.c.b16 %v363, %v362
  %v461 = vpack.c.b16 %v365, %v364
  %v462 = vpack.c.b16 %v367, %v366
  %v463 = vpack.c.b16 %v369, %v368
  %v464 = vpack.c.b16 %v371, %v370
  %v465 = vpack.c.b16 %v373, %v372
  %v466 = vpack.c.b16 %v375, %v374
  %v467 = vpack.c.b16 %v377, %v376
  %v468 = vpack.c.b16 %v379, %v378
  %v469 = vpack.c.b16 %v381, %v380
  %v470 = vpack.c.b16 %v383, %v382
  %v471 = vpack.c.b16 %v385, %v384
  %v472 = vpack.c.b16 %v387, %v386
  %v473 = vpack.c.b16 %v389, %v388
  %v474 = vpack.c.b16 %v391, %v390
  %v475 = vpack.c.b16 %v393, %v392
  %v476 = vpack.c.b16 %v395, %v394
  %v477 = vpack.c.b16 %v397, %v396
  %v478 = vpack.c.b16 %v399, %v398
  %v479 = vpack.c.b16 %v401, %v400
  %v480 = vpack.c.b16 %v403, %v402
  %v481 = vpack.c.b16 %v405, %v404
  %v482 = vpack.c.b16 %v407, %v406
  %v483 = vpack.c.b16 %v409, %v408
  %v484 = vpack.c.b16 %v411, %v410
  %v485 = vpack.c.b16 %v413, %v412
  %v486 = vpack.c.b16 %v415, %v414
  %v487 = vpack.c.b16 %v417, %v416
  %v488 = vpack.c.b16 %v419, %v418
  %v489 = vpack.c.b16 %v421, %v420
  %v490 = vpack.c.b16 %v423, %v422
  %v491 = vpack.c.b16 %v425, %v424
  %v492 = vpack.c.b16 %v427, %v426
  %v493 = vpack.c.b16 %v429, %v428
  %558 = vmatpush.bf16.msra.mxu0 %v437
  %559 = vmatpush.bf16.msra.mxu0 %v436
  %560 = vmatpush.bf16.msra.mxu0 %v435
  %561 = vmatpush.bf16.msra.mxu0 %v434
  %562 = vmatpush.bf16.msra.mxu0 %v433
  %563 = vmatpush.bf16.msra.mxu0 %v432
  %564 = vmatpush.bf16.msra.mxu0 %v431
  %565 = vmatpush.bf16.msra.mxu0 %v430
  %566 = vmatmul.bf16.gmra.mxu0 %v34
  %v567 = vpop.f32.mrf.mxu0
  %v568 = vadd.f32 %v172, %v567
  %v569 = vpop.f32.mrf.mxu0
  %570 = vdwg.mxu0
  %571 = vmatpush.bf16.msra.mxu0 %v445
  %572 = vmatpush.bf16.msra.mxu0 %v444
  %573 = vmatpush.bf16.msra.mxu0 %v443
  %574 = vmatpush.bf16.msra.mxu0 %v442
  %575 = vmatpush.bf16.msra.mxu0 %v441
  %576 = vmatpush.bf16.msra.mxu0 %v440
  %577 = vmatpush.bf16.msra.mxu0 %v439
  %578 = vmatpush.bf16.msra.mxu0 %v438
  %579 = vmatmul.bf16.gmra.mxu0 %v35
  %v580 = vpop.f32.mrf.mxu0
  %v581 = vadd.f32 %v568, %v580
  %v582 = vpop.f32.mrf.mxu0
  %583 = vdwg.mxu0
  %584 = vmatpush.bf16.msra.mxu0 %v453
  %585 = vmatpush.bf16.msra.mxu0 %v452
  %586 = vmatpush.bf16.msra.mxu0 %v451
  %587 = vmatpush.bf16.msra.mxu0 %v450
  %588 = vmatpush.bf16.msra.mxu0 %v449
  %589 = vmatpush.bf16.msra.mxu0 %v448
  %590 = vmatpush.bf16.msra.mxu0 %v447
  %591 = vmatpush.bf16.msra.mxu0 %v446
  %592 = vmatmul.bf16.gmra.mxu0 %v36
  %v593 = vpop.f32.mrf.mxu0
  %v594 = vadd.f32 %v581, %v593
  %v595 = vpop.f32.mrf.mxu0
  %596 = vdwg.mxu0
  %597 = vmatpush.bf16.msra.mxu0 %v461
  %598 = vmatpush.bf16.msra.mxu0 %v460
  %599 = vmatpush.bf16.msra.mxu0 %v459
  %600 = vmatpush.bf16.msra.mxu0 %v458
  %601 = vmatpush.bf16.msra.mxu0 %v457
  %602 = vmatpush.bf16.msra.mxu0 %v456
  %603 = vmatpush.bf16.msra.mxu0 %v455
  %604 = vmatpush.bf16.msra.mxu0 %v454
  %605 = vmatmul.bf16.gmra.mxu0 %v37
  %v606 = vpop.f32.mrf.mxu0
  %v607 = vadd.f32 %v594, %v606
  %v608 = vpop.f32.mrf.mxu0
  %609 = vdwg.mxu0
  %610 = vmatpush.bf16.msra.mxu0 %v469
  %611 = vmatpush.bf16.msra.mxu0 %v468
  %612 = vmatpush.bf16.msra.mxu0 %v467
  %613 = vmatpush.bf16.msra.mxu0 %v466
  %614 = vmatpush.bf16.msra.mxu0 %v465
  %615 = vmatpush.bf16.msra.mxu0 %v464
  %616 = vmatpush.bf16.msra.mxu0 %v463
  %617 = vmatpush.bf16.msra.mxu0 %v462
  %618 = vmatmul.bf16.gmra.mxu0 %v38
  %v619 = vpop.f32.mrf.mxu0
  %v620 = vadd.f32 %v607, %v619
  %v621 = vpop.f32.mrf.mxu0
  %622 = vdwg.mxu0
  %623 = vmatpush.bf16.msra.mxu0 %v477
  %624 = vmatpush.bf16.msra.mxu0 %v476
  %625 = vmatpush.bf16.msra.mxu0 %v475
  %626 = vmatpush.bf16.msra.mxu0 %v474
  %627 = vmatpush.bf16.msra.mxu0 %v473
  %628 = vmatpush.bf16.msra.mxu0 %v472
  %629 = vmatpush.bf16.msra.mxu0 %v471
  %630 = vmatpush.bf16.msra.mxu0 %v470
  %631 = vmatmul.bf16.gmra.mxu0 %v39
  %v632 = vpop.f32.mrf.mxu0
  %v633 = vadd.f32 %v620, %v632
  %v634 = vpop.f32.mrf.mxu0
  %635 = vdwg.mxu0
  %636 = vmatpush.bf16.msra.mxu0 %v485
  %637 = vmatpush.bf16.msra.mxu0 %v484
  %638 = vmatpush.bf16.msra.mxu0 %v483
  %639 = vmatpush.bf16.msra.mxu0 %v482
  %640 = vmatpush.bf16.msra.mxu0 %v481
  %641 = vmatpush.bf16.msra.mxu0 %v480
  %642 = vmatpush.bf16.msra.mxu0 %v479
  %643 = vmatpush.bf16.msra.mxu0 %v478
  %644 = vmatmul.bf16.gmra.mxu0 %v40
  %v645 = vpop.f32.mrf.mxu0
  %v646 = vadd.f32 %v633, %v645
  %v647 = vpop.f32.mrf.mxu0
  %648 = vdwg.mxu0
  %649 = vmatpush.bf16.msra.mxu0 %v493
  %650 = vmatpush.bf16.msra.mxu0 %v492
  %651 = vmatpush.bf16.msra.mxu0 %v491
  %652 = vmatpush.bf16.msra.mxu0 %v490
  %653 = vmatpush.bf16.msra.mxu0 %v489
  %654 = vmatpush.bf16.msra.mxu0 %v488
  %655 = vmatpush.bf16.msra.mxu0 %v487
  %656 = vmatpush.bf16.msra.mxu0 %v486
  %657 = vmatmul.bf16.gmra.mxu0 %v41
  %v658 = vpop.f32.mrf.mxu0
  %v659 = vadd.f32 %v646, %v658
  %v660 = vpop.f32.mrf.mxu0
  %661 = vdwg.mxu0
  %v662 = vmax.f32 %v659, 0.0
  %v663 = vld [vmem:[%s2] sm:$0xff]
  %v664 = vld [vmem:[%s2 + $0x8] sm:$0xff]
  %v665 = vld [vmem:[%s2 + $0x10] sm:$0xff]
  %v666 = vld [vmem:[%s2 + $0x18] sm:$0xff]
  %v667 = vld [vmem:[%s2 + $0x20] sm:$0xff]
  %v668 = vld [vmem:[%s2 + $0x28] sm:$0xff]
  %v669 = vld [vmem:[%s2 + $0x30] sm:$0xff]
  %v670 = vld [vmem:[%s2 + $0x38] sm:$0xff]
  %v671 = vld [vmem:[%s2 + $0x40] sm:$0xff]
  %v672 = vld [vmem:[%s2 + $0x48] sm:$0xff]
  %v673 = vld [vmem:[%s2 + $0x50] sm:$0xff]
  %v674 = vld [vmem:[%s2 + $0x58] sm:$0xff]
  %v675 = vld [vmem:[%s2 + $0x60] sm:$0xff]
  %v676 = vld [vmem:[%s2 + $0x68] sm:$0xff]
  %v677 = vld [vmem:[%s2 + $0x70] sm:$0xff]
  %v678 = vld [vmem:[%s2 + $0x78] sm:$0xff]
  %v679 = vld [vmem:[%s5] sm:$0x1]
  %v681 = vperm.slane %v679, 0
  %683 = vmatpush.msra.mxu0 %v678
  %684 = vmatpush.msra.mxu0 %v677
  %685 = vmatpush.msra.mxu0 %v676
  %686 = vmatpush.msra.mxu0 %v675
  %687 = vmatpush.msra.mxu0 %v674
  %688 = vmatpush.msra.mxu0 %v673
  %689 = vmatpush.msra.mxu0 %v672
  %690 = vmatpush.msra.mxu0 %v671
  %691 = vmatpush.msra.mxu0 %v670
  %692 = vmatpush.msra.mxu0 %v669
  %693 = vmatpush.msra.mxu0 %v668
  %694 = vmatpush.msra.mxu0 %v667
  %695 = vmatpush.msra.mxu0 %v666
  %696 = vmatpush.msra.mxu0 %v665
  %697 = vmatpush.msra.mxu0 %v664
  %698 = vmatpush.msra.mxu0 %v663
  %699 = vmatmul.f32.gmra.mxu0 %v662
  %v700 = vpop.f32.mrf.mxu0
  %v701 = vadd.f32 %v681, %v700
  %702 = vdwg.mxu0
  %v703 = vmax.f32 %v701, 0.0
  %v704 = vld [vmem:[%s3] sm:$0xff]
  %v705 = vld [vmem:[%s3 + $0x8] sm:$0xff]
  %v706 = vld [vmem:[%s3 + $0x10] sm:$0xff]
  %v707 = vld [vmem:[%s3 + $0x18] sm:$0xff]
  %v708 = vld [vmem:[%s3 + $0x20] sm:$0xff]
  %v709 = vld [vmem:[%s3 + $0x28] sm:$0xff]
  %v710 = vld [vmem:[%s3 + $0x30] sm:$0xff]
  %v711 = vld [vmem:[%s3 + $0x38] sm:$0xff]
  %v712 = vld [vmem:[%s3 + $0x40] sm:$0xff]
  %v713 = vld [vmem:[%s3 + $0x48] sm:$0xff]
  %v714 = vld [vmem:[%s3 + $0x50] sm:$0xff]
  %v715 = vld [vmem:[%s3 + $0x58] sm:$0xff]
  %v716 = vld [vmem:[%s3 + $0x60] sm:$0xff]
  %v717 = vld [vmem:[%s3 + $0x68] sm:$0xff]
  %v718 = vld [vmem:[%s3 + $0x70] sm:$0xff]
  %v719 = vld [vmem:[%s3 + $0x78] sm:$0xff]
  %v720 = vld [vmem:[%s6] sm:$0x1]
  %v722 = vperm.slane %v720, 0
  %724 = vmatpush.msra.mxu0 %v719
  %725 = vmatpush.msra.mxu0 %v718
  %726 = vmatpush.msra.mxu0 %v717
  %727 = vmatpush.msra.mxu0 %v716
  %728 = vmatpush.msra.mxu0 %v715
  %729 = vmatpush.msra.mxu0 %v714
  %730 = vmatpush.msra.mxu0 %v713
  %731 = vmatpush.msra.mxu0 %v712
  %732 = vmatpush.msra.mxu0 %v711
  %733 = vmatpush.msra.mxu0 %v710
  %734 = vmatpush.msra.mxu0 %v709
  %735 = vmatpush.msra.mxu0 %v708
  %736 = vmatpush.msra.mxu0 %v707
  %737 = vmatpush.msra.mxu0 %v706
  %738 = vmatpush.msra.mxu0 %v705
  %739 = vmatpush.msra.mxu0 %v704
  %740 = vmatmul.f32.gmra.mxu0 %v703
  %v741 = vpop.f32.mrf.mxu0
  %v742 = vadd.f32 %v722, %v741
  %743 = vdwg.mxu0
  %744 = vst [vmem:[%s7] sm:$0xff] %v742
  // Predicated region
  $region30: #{qnet_forward.1} parent=0 // pred_check
    _
  $region31: #{qnet_forward.1} parent=0 // pred_check_branch
    %746 = sbr.rel (0) target = $region33
  $region32: #{qnet_forward.1} parent=0 // pred_region
    _
  $region33: #{qnet_forward.1} parent=0 // pred_fallthru
    _
  // Predicated region
  $region34: #{qnet_forward.1} parent=0 // pred_check
    _
  $region35: #{qnet_forward.1} parent=0 // pred_check_branch
    %748 = sbr.rel (0) target = $region37
  $region36: #{qnet_forward.1} parent=0 // pred_region
    _
  $region37: #{qnet_forward.1} parent=0 // pred_fallthru
    _

</llo_original>
